<compile_context>
chip_gen: v6e
topology: v6e:2x2x1
jax: 0.10.0
libtpu: 0.0.40
codegen_flags: <defaults>
</compile_context>

<pallas_src>
import jax
import jax.numpy as jnp
from jax.experimental import pallas as pl
from jax.experimental.pallas import tpu as pltpu


def _round_up(x: int, m: int) -> int:
    return ((x + m - 1) // m) * m


def _mlp_softmax_kernel(x_ref, w1_ref, b1_ref, w2_ref, b2_ref, o_ref):
    # hidden = relu(x @ W1 + b1)   -- bf16 MXU inputs, f32 accumulation
    x_bf = x_ref[...].astype(jnp.bfloat16)
    h = jnp.dot(x_bf, w1_ref[...], preferred_element_type=jnp.float32)
    h = jnp.maximum(h + b1_ref[...], 0.0)                       # (TB, Hp) f32

    # logits = hidden @ W2 + b2  (padded Hp rows of W2 are zero -> no effect)
    logits = jnp.dot(h.astype(jnp.bfloat16), w2_ref[...],
                     preferred_element_type=jnp.float32)
    logits = logits + b2_ref[...]                               # (TB, O) f32

    # Numerically stable softmax over the (unpadded) class axis.
    m = jnp.max(logits, axis=-1, keepdims=True)
    e = jnp.exp(logits - m)
    denom = jnp.sum(e, axis=-1, keepdims=True)
    o_ref[...] = (e * pl.reciprocal(denom, approx=False)).astype(o_ref.dtype)


def _choose_batch_tiling(B, F, Hp, O, block_b, vmem_budget_bytes):
    """Pick (TB, Bp, n_tiles): balanced, 8-aligned, VMEM-budget-capped tiles."""
    # VMEM bytes that scale with the batch tile TB:
    #   x double-buffer (2*F*4) + out double-buffer (2*O*4)
    #   + in-kernel intermediates: x bf16 (F*2), h f32 (Hp*4), h bf16 (Hp*2),
    #     logits / e / probs (~3*O*4)
    per_row = 10 * F + 6 * Hp + 20 * O
    resident = 2 * (F * Hp * 2 + Hp * 4 + Hp * O * 2 + O * 4)   # weights + biases
    tb_cap = (vmem_budget_bytes - resident) // per_row
    tb_cap = max(8, (tb_cap // 8) * 8)
    block_b = max(8, min(block_b, tb_cap))

    n_tiles = pl.cdiv(B, block_b)
    if n_tiles > 1 and n_tiles % 2 == 1:
        n_tiles += 1                      # even grid -> both v7x TCs stay busy
    TB = _round_up(pl.cdiv(B, n_tiles), 8)
    Bp = n_tiles * TB                     # at most TB-1 (+balance) padded rows
    return TB, Bp, n_tiles


def linear_net_forward(x, w1, b1, w2, b2, *, block_b=2048,
                       vmem_limit_bytes=48 << 20):
    """x: (B, F); w1: (F, H); b1: (1, H); w2: (H, O); b2: (1, O) -> (B, O) probs."""
    B, F = x.shape
    H = w1.shape[1]
    O = w2.shape[1]
    Hp = _round_up(H, 128)                # hidden padded for lane-dense MXU tiles

    TB, Bp, n_tiles = _choose_batch_tiling(
        B, F, Hp, O, block_b, vmem_limit_bytes - (8 << 20))

    # x goes in unpadded on the feature dim; pad batch only if the tiling needs it.
    x_p = x if Bp == B else jnp.zeros((Bp, F), x.dtype).at[:B].set(x)

    # Resident weights: padded once, cast to bf16 (halves their DMA/VMEM bytes).
    w1_p = jnp.zeros((F, Hp), jnp.bfloat16).at[:, :H].set(w1.astype(jnp.bfloat16))
    b1_p = jnp.zeros((1, Hp), jnp.float32).at[:, :H].set(b1.astype(jnp.float32))
    w2_p = jnp.zeros((Hp, O), jnp.bfloat16).at[:H, :].set(w2.astype(jnp.bfloat16))
    b2_p = b2.astype(jnp.float32).reshape(1, O)

    flops = 2 * Bp * (F * Hp + Hp * O) + 5 * Bp * O
    bytes_accessed = (Bp * F * 4 + F * Hp * 2 + Hp * 4 + Hp * O * 2 + O * 4
                      + Bp * O * 4)

    out_p = pl.pallas_call(
        _mlp_softmax_kernel,
        out_shape=jax.ShapeDtypeStruct((Bp, O), jnp.float32),
        grid_spec=pltpu.PrefetchScalarGridSpec(
            num_scalar_prefetch=0,
            grid=(n_tiles,),
            in_specs=[
                pl.BlockSpec((TB, F), lambda i: (i, 0)),   # streamed, unpadded x
                pl.BlockSpec((F, Hp), lambda i: (0, 0)),   # VMEM-resident weights
                pl.BlockSpec((1, Hp), lambda i: (0, 0)),
                pl.BlockSpec((Hp, O), lambda i: (0, 0)),
                pl.BlockSpec((1, O), lambda i: (0, 0)),
            ],
            out_specs=pl.BlockSpec((TB, O), lambda i: (i, 0)),  # lane-true output
        ),
        compiler_params=pltpu.CompilerParams(
            dimension_semantics=("parallel",),
            vmem_limit_bytes=vmem_limit_bytes,
        ),
        cost_estimate=pl.CostEstimate(
            flops=flops,
            transcendentals=Bp * O,
            bytes_accessed=bytes_accessed,
        ),
    )(x_p, w1_p, b1_p, w2_p, b2_p)

    return out_p if Bp == B else out_p[:B]


def reference_forward(x, w1, b1, w2, b2):
    h = jnp.maximum(x @ w1 + b1, 0.0)
    logits = h @ w2 + b2
    return jax.nn.softmax(logits, axis=-1)


if __name__ == "__main__":
    # Small shapes consistent with LinearNet(n_feature, n_hidden, n_output).
    B, n_feature, n_hidden, n_output = 8, 32, 64, 16

    key = jax.random.PRNGKey(0)
    kx, kw1, kb1, kw2, kb2 = jax.random.split(key, 5)

    x = jax.random.normal(kx, (B, n_feature), dtype=jnp.float32)

    # PyTorch Linear stores (out, in); we keep the transposed (in, out) layout
    # for the kernel's x @ W convention.
    bound1 = 1.0 / jnp.sqrt(n_feature)
    w1 = jax.random.uniform(kw1, (n_feature, n_hidden), jnp.float32, -bound1, bound1)
    b1 = jax.random.uniform(kb1, (1, n_hidden), jnp.float32, -bound1, bound1)
    bound2 = 1.0 / jnp.sqrt(n_hidden)
    w2 = jax.random.uniform(kw2, (n_hidden, n_output), jnp.float32, -bound2, bound2)
    b2 = jax.random.uniform(kb2, (1, n_output), jnp.float32, -bound2, bound2)

    out = linear_net_forward(x, w1, b1, w2, b2)
    out = jax.block_until_ready(out)

    ref = reference_forward(x, w1, b1, w2, b2)
    assert out.shape == (B, n_output)
    # bf16 MXU inputs -> loosened tolerance vs the f32 reference.
    assert jnp.allclose(out, ref, atol=1e-2, rtol=1e-2)
    # Exact (non-approx) normalization -> rows sum to 1 to f32 precision.
    assert jnp.allclose(jnp.sum(out, axis=-1), jnp.ones((B,)), atol=1e-3)

    print("KERNEL_OK")
</pallas_src>

<mosaic_0001>
module attributes {stable_mosaic.version = 11 : i64} {
  func.func @_mlp_softmax_kernel(%arg0: i32, %arg1: memref<8x32xf32, #tpu.memory_space<vmem>>, %arg2: memref<32x128xbf16, #tpu.memory_space<vmem>>, %arg3: memref<1x128xf32, #tpu.memory_space<vmem>>, %arg4: memref<128x16xbf16, #tpu.memory_space<vmem>>, %arg5: memref<1x16xf32, #tpu.memory_space<vmem>>, %arg6: memref<8x16xf32, #tpu.memory_space<vmem>>) attributes {dimension_semantics = [#tpu.dimension_semantics<parallel>], iteration_bounds = array<i64: 1>, scalar_prefetch = 0 : i64, scratch_operands = 0 : i64, tpu.core_type = #tpu.core_type<tc>, window_params = [{transform_indices = @transform_0, window_bounds = array<i64: 8, 32>}, {pipeline_mode = #tpu.pipeline_mode<synchronous>, transform_indices = @transform_1, window_bounds = array<i64: 32, 128>}, {pipeline_mode = #tpu.pipeline_mode<synchronous>, transform_indices = @transform_2, window_bounds = array<i64: 1, 128>}, {pipeline_mode = #tpu.pipeline_mode<synchronous>, transform_indices = @transform_3, window_bounds = array<i64: 128, 16>}, {pipeline_mode = #tpu.pipeline_mode<synchronous>, transform_indices = @transform_4, window_bounds = array<i64: 1, 16>}, {transform_indices = @transform_5, window_bounds = array<i64: 8, 16>}]} {
    %c0 = arith.constant 0 : index
    %c0_0 = arith.constant 0 : index
    %0 = vector.load %arg1[%c0, %c0_0] : memref<8x32xf32, #tpu.memory_space<vmem>>, vector<8x32xf32>
    %1 = arith.truncf %0 : vector<8x32xf32> to vector<8x32xbf16>
    %c0_1 = arith.constant 0 : index
    %c0_2 = arith.constant 0 : index
    %2 = vector.load %arg2[%c0_1, %c0_2] : memref<32x128xbf16, #tpu.memory_space<vmem>>, vector<32x128xbf16>
    %cst = arith.constant dense<0.000000e+00> : vector<8x128xf32>
    %3 = tpu.matmul %1, %2, %cst {dimension_numbers = #tpu.dot_dimension_numbers<[1], [0], [0], [1], [0, 0, 1, 1], [], []>} : vector<8x32xbf16>, vector<32x128xbf16>, vector<8x128xf32> -> vector<8x128xf32>
    %c0_3 = arith.constant 0 : index
    %c0_4 = arith.constant 0 : index
    %4 = vector.load %arg3[%c0_3, %c0_4] : memref<1x128xf32, #tpu.memory_space<vmem>>, vector<1x128xf32>
    %5 = vector.broadcast %4 : vector<1x128xf32> to vector<8x128xf32>
    %6 = arith.addf %3, %5 : vector<8x128xf32>
    %cst_5 = arith.constant 0.000000e+00 : f32
    %7 = vector.broadcast %cst_5 : f32 to vector<8x128xf32>
    %8 = arith.maximumf %6, %7 : vector<8x128xf32>
    %9 = arith.truncf %8 : vector<8x128xf32> to vector<8x128xbf16>
    %c0_6 = arith.constant 0 : index
    %c0_7 = arith.constant 0 : index
    %10 = vector.load %arg4[%c0_6, %c0_7] : memref<128x16xbf16, #tpu.memory_space<vmem>>, vector<128x16xbf16>
    %cst_8 = arith.constant dense<0.000000e+00> : vector<8x16xf32>
    %11 = tpu.matmul %9, %10, %cst_8 {dimension_numbers = #tpu.dot_dimension_numbers<[1], [0], [0], [1], [0, 0, 1, 1], [], []>} : vector<8x128xbf16>, vector<128x16xbf16>, vector<8x16xf32> -> vector<8x16xf32>
    %c0_9 = arith.constant 0 : index
    %c0_10 = arith.constant 0 : index
    %12 = vector.load %arg5[%c0_9, %c0_10] : memref<1x16xf32, #tpu.memory_space<vmem>>, vector<1x16xf32>
    %13 = vector.broadcast %12 : vector<1x16xf32> to vector<8x16xf32>
    %14 = arith.addf %11, %13 : vector<8x16xf32>
    %cst_11 = arith.constant dense<0xFF800000> : vector<8xf32>
    %15 = vector.multi_reduction <maximumf>, %14, %cst_11 [1] : vector<8x16xf32> to vector<8xf32>
    %16 = vector.shape_cast %15 : vector<8xf32> to vector<8x1xf32>
    %17 = vector.broadcast %16 : vector<8x1xf32> to vector<8x16xf32>
    %18 = arith.subf %14, %17 : vector<8x16xf32>
    %19 = math.exp %18 : vector<8x16xf32>
    %cst_12 = arith.constant dense<0.000000e+00> : vector<8xf32>
    %20 = vector.multi_reduction <add>, %19, %cst_12 [1] : vector<8x16xf32> to vector<8xf32>
    %21 = vector.shape_cast %20 : vector<8xf32> to vector<8x1xf32>
    %22 = tpu.reciprocal %21 : vector<8x1xf32> -> vector<8x1xf32>
    %23 = vector.broadcast %22 : vector<8x1xf32> to vector<8x16xf32>
    %24 = arith.mulf %19, %23 : vector<8x16xf32>
    %c0_13 = arith.constant 0 : index
    %c0_14 = arith.constant 0 : index
    %25 = vector.load %arg6[%c0_13, %c0_14] : memref<8x16xf32, #tpu.memory_space<vmem>>, vector<8x16xf32>
    tpu.vector_store %arg6[%c0_13, %c0_14], %24 {strides = array<i32>} : memref<8x16xf32, #tpu.memory_space<vmem>>, vector<8x16xf32>,
    return
  }
  func.func @transform_0(%arg0: i32) -> (i32, i32) {
    %c0_i32 = arith.constant 0 : i32
    %c0_i32_0 = arith.constant 0 : i32
    return %arg0, %c0_i32 : i32, i32
  }
  func.func @transform_1(%arg0: i32) -> (i32, i32) {
    %c0_i32 = arith.constant 0 : i32
    %c0_i32_0 = arith.constant 0 : i32
    %c0_i32_1 = arith.constant 0 : i32
    return %c0_i32, %c0_i32_0 : i32, i32
  }
  func.func @transform_2(%arg0: i32) -> (i32, i32) {
    %c0_i32 = arith.constant 0 : i32
    %c0_i32_0 = arith.constant 0 : i32
    %c0_i32_1 = arith.constant 0 : i32
    return %c0_i32, %c0_i32_0 : i32, i32
  }
  func.func @transform_3(%arg0: i32) -> (i32, i32) {
    %c0_i32 = arith.constant 0 : i32
    %c0_i32_0 = arith.constant 0 : i32
    %c0_i32_1 = arith.constant 0 : i32
    return %c0_i32, %c0_i32_0 : i32, i32
  }
  func.func @transform_4(%arg0: i32) -> (i32, i32) {
    %c0_i32 = arith.constant 0 : i32
    %c0_i32_0 = arith.constant 0 : i32
    %c0_i32_1 = arith.constant 0 : i32
    return %c0_i32, %c0_i32_0 : i32, i32
  }
  func.func @transform_5(%arg0: i32) -> (i32, i32) {
    %c0_i32 = arith.constant 0 : i32
    %c0_i32_0 = arith.constant 0 : i32
    return %arg0, %c0_i32 : i32, i32
  }
}

</mosaic_0001>

<llo_original>
// kernel: tpu_custom_call.1
$region0: #{tpu_custom_call.1}
  #allocation0 [shape = 'u32[]', space=smem, size = 0x4, offset = 0x4, fixed_abs, tag = 'smem constant byte address 0x4 - core index']
  #allocation1 [shape = 'u32[144,128]{1,0:T(1,128)}', space=vmem, size = 0x12000, scoped, tag = 'internal scratch']
  %s0 = inlined_call_operand.vmem [shape: f32[8,32], index: 0, kind: input, shape index: {}]
  %s1 = inlined_call_operand.vmem [shape: bf16[32,128], index: 1, kind: input, shape index: {}]
  %s2 = inlined_call_operand.vmem [shape: f32[1,128], index: 2, kind: input, shape index: {}]
  %s3 = inlined_call_operand.vmem [shape: bf16[128,16], index: 3, kind: input, shape index: {}]
  %s4 = inlined_call_operand.vmem [shape: f32[1,16], index: 4, kind: input, shape index: {}]
  %s5 = inlined_call_operand.hbm [shape: f32[8,16], index: 5, kind: output, shape index: {}]
  %s6 = sld [smem:[#allocation0]]
  $region30: #{tpu_custom_call.1} parent=0
    _
  %s8 = ssub.s32 1, %s6
  %s9 = scalar_select 0, %s8, %s6
  $region1: #{tpu_custom_call.1} parent=0
    #allocation2 [shape = 'u8[4096]{0}', space=vmem, size = 0x1000, scoped, tag = 'output window, operand 0, single buffered']
    #allocation3 [shape = 's32[1]{0}', space=sflag, size = 0x4, scoped, tag = 'scoped memory for tpu_custom_call.1']
    %10 = vsyncpa [#allocation3], 0
    // Predicated region
    $region2: #{tpu_custom_call.1} parent=1 // pred_check
      _
    $region3: #{tpu_custom_call.1} parent=1 // pred_check_branch
      %12 = sbr.rel (0) target = $region5
    $region4: #{tpu_custom_call.1} parent=1 // pred_region
      _
    $region5: #{tpu_custom_call.1} parent=1 // pred_fallthru
      _
    // Predicated region
    $region6: #{tpu_custom_call.1} parent=1 // pred_check
      _
    $region7: #{tpu_custom_call.1} parent=1 // pred_check_branch
      %14 = sbr.rel (0) target = $region9
    $region8: #{tpu_custom_call.1} parent=1 // pred_region
      _
    $region9: #{tpu_custom_call.1} parent=1 // pred_fallthru
      _
    // Predicated region
    $region10: #{tpu_custom_call.1} parent=1 // pred_check
      _
    $region11: #{tpu_custom_call.1} parent=1 // pred_check_branch
      %16 = sbr.rel (0) target = $region13
    $region12: #{tpu_custom_call.1} parent=1 // pred_region
      _
    $region13: #{tpu_custom_call.1} parent=1 // pred_fallthru
      _
    // Predicated region
    $region14: #{tpu_custom_call.1} parent=1 // pred_check
      _
    $region15: #{tpu_custom_call.1} parent=1 // pred_check_branch
      %18 = sbr.rel (0) target = $region17
    $region16: #{tpu_custom_call.1} parent=1 // pred_region
      _
    $region17: #{tpu_custom_call.1} parent=1 // pred_fallthru
      _
    // Predicated region
    $region18: #{tpu_custom_call.1} parent=1 // pred_check
      _
    $region19: #{tpu_custom_call.1} parent=1 // pred_check_branch
      %20 = sbr.rel (0) target = $region21
    $region20: #{tpu_custom_call.1} parent=1 // pred_region
      _
    $region21: #{tpu_custom_call.1} parent=1 // pred_fallthru
      _
    %v22 = vld [vmem:[%s0] sm:$0xff]
    %v23 = vpack.c.bf16 %v22, %v22
    %v24 = vld [vmem:[%s1] sm:$0xf]
    %v25 = vld [vmem:[%s1 + $0x4] sm:$0xf]
    %v26 = vld [vmem:[%s1 + $0x8] sm:$0xf]
    %v27 = vld [vmem:[%s1 + $0xc] sm:$0xf]
    %v28 = vld [vmem:[%s2] sm:$0x1]
    %v30 = vlaneseq
    %v31 = vshrl.u32 %v30, 7
    %v32 = vsub.s32 0, %v31
    %v33 = vrot.slane %v28, %v32
    %v39 = vunpack.c.l.b16 %v24
    %v40 = vunpack.c.l.b16 %v25
    %v41 = vunpack.c.l.b16 %v26
    %v42 = vunpack.c.l.b16 %v27
    %v43 = vpack.c.b16 %v40, %v39
    %v44 = vpack.c.b16 %v42, %v41
    %vm47 = vcmask 261120
    %v49 = vsel %vm47, %v23, 0
    %51 = vmatprep.subr.bf16.mxu0 0
    %52 = vmatpush1.bf16.msra.mxu0 0
    %53 = vmatprep.subr.bf16.mxu0 0
    %54 = vmatpush1.bf16.msra.mxu0 0
    %55 = vmatprep.subr.bf16.mxu0 0
    %56 = vmatpush1.bf16.msra.mxu0 0
    %57 = vmatprep.subr.bf16.mxu0 0
    %58 = vmatpush1.bf16.msra.mxu0 0
    %59 = vmatprep.subr.bf16.mxu0 0
    %60 = vmatpush1.bf16.msra.mxu0 0
    %61 = vmatprep.subr.bf16.mxu0 0
    %62 = vmatpush1.bf16.msra.mxu0 0
    %63 = vmatprep.subr.bf16.mxu0 0
    %64 = vmatpush1.bf16.msra.mxu0 %v44
    %65 = vmatprep.subr.bf16.mxu0 0
    %66 = vmatpush1.bf16.msra.mxu0 %v43
    %67 = vmatprep.subr.bf16.mxu0 0
    %68 = vmatpush2.bf16.msra.mxu0 0
    %69 = vmatprep.subr.bf16.mxu0 0
    %70 = vmatpush2.bf16.msra.mxu0 0
    %71 = vmatprep.subr.bf16.mxu0 0
    %72 = vmatpush2.bf16.msra.mxu0 0
    %73 = vmatprep.subr.bf16.mxu0 0
    %74 = vmatpush2.bf16.msra.mxu0 0
    %75 = vmatprep.subr.bf16.mxu0 0
    %76 = vmatpush2.bf16.msra.mxu0 0
    %77 = vmatprep.subr.bf16.mxu0 0
    %78 = vmatpush2.bf16.msra.mxu0 0
    %79 = vmatprep.subr.bf16.mxu0 0
    %80 = vmatpush2.bf16.msra.mxu0 0
    %81 = vmatprep.subr.bf16.mxu0 0
    %82 = vmatpush2.bf16.msra.mxu0 0
    %83 = vmatprep.mubr.bf16.mxu0 0
    %84 = vmatmul.mubr.bf16.gmra.mxu0 %v49
    %v85 = vpop.f32.mrf.mxu0
    %v86 = vadd.f32 %v33, %v85
    %v87 = vpop.f32.mrf.mxu0
    %v88 = vpop.f32.mrf.mxu0
    %v89 = vpop.f32.mrf.mxu0
    %90 = vdwg.mxu0
    %v91 = vmax.f32 %v86, 0.0
    %v92 = vpack.c.bf16 %v91, %v91
    %v93 = vld [vmem:[%s3] sm:$0xf]
    %v94 = vld [vmem:[%s3 + $0x4] sm:$0xf]
    %v95 = vld [vmem:[%s3 + $0x8] sm:$0xf]
    %v96 = vld [vmem:[%s3 + $0xc] sm:$0xf]
    %v97 = vld [vmem:[%s3 + $0x10] sm:$0xf]
    %v98 = vld [vmem:[%s3 + $0x14] sm:$0xf]
    %v99 = vld [vmem:[%s3 + $0x18] sm:$0xf]
    %v100 = vld [vmem:[%s3 + $0x1c] sm:$0xf]
    %v101 = vld [vmem:[%s3 + $0x20] sm:$0xf]
    %v102 = vld [vmem:[%s3 + $0x24] sm:$0xf]
    %v103 = vld [vmem:[%s3 + $0x28] sm:$0xf]
    %v104 = vld [vmem:[%s3 + $0x2c] sm:$0xf]
    %v105 = vld [vmem:[%s3 + $0x30] sm:$0xf]
    %v106 = vld [vmem:[%s3 + $0x34] sm:$0xf]
    %v107 = vld [vmem:[%s3 + $0x38] sm:$0xf]
    %v108 = vld [vmem:[%s3 + $0x3c] sm:$0xf]
    %v109 = vld [vmem:[%s4] sm:$0x1]
    %v111 = vlaneseq
    %v112 = vshrl.u32 %v111, 7
    %v113 = vsub.s32 0, %v112
    %v114 = vrot.slane %v109, %v113
    %v132 = vunpack.c.l.b16 %v93
    %v133 = vunpack.c.l.b16 %v94
    %v134 = vunpack.c.l.b16 %v95
    %v135 = vunpack.c.l.b16 %v96
    %v136 = vunpack.c.l.b16 %v97
    %v137 = vunpack.c.l.b16 %v98
    %v138 = vunpack.c.l.b16 %v99
    %v139 = vunpack.c.l.b16 %v100
    %v140 = vunpack.c.l.b16 %v101
    %v141 = vunpack.c.l.b16 %v102
    %v142 = vunpack.c.l.b16 %v103
    %v143 = vunpack.c.l.b16 %v104
    %v144 = vunpack.c.l.b16 %v105
    %v145 = vunpack.c.l.b16 %v106
    %v146 = vunpack.c.l.b16 %v107
    %v147 = vunpack.c.l.b16 %v108
    %v148 = vpack.c.b16 %v133, %v132
    %v149 = vpack.c.b16 %v135, %v134
    %v150 = vpack.c.b16 %v137, %v136
    %v151 = vpack.c.b16 %v139, %v138
    %v152 = vpack.c.b16 %v141, %v140
    %v153 = vpack.c.b16 %v143, %v142
    %v154 = vpack.c.b16 %v145, %v144
    %v155 = vpack.c.b16 %v147, %v146
    %164 = vmatprep.subr.bf16.mxu0 0
    %165 = vmatpush1.bf16.msra.mxu0 %v155
    %166 = vmatprep.subr.bf16.mxu0 0
    %167 = vmatpush1.bf16.msra.mxu0 %v154
    %168 = vmatprep.subr.bf16.mxu0 0
    %169 = vmatpush1.bf16.msra.mxu0 %v153
    %170 = vmatprep.subr.bf16.mxu0 0
    %171 = vmatpush1.bf16.msra.mxu0 %v152
    %172 = vmatprep.subr.bf16.mxu0 0
    %173 = vmatpush1.bf16.msra.mxu0 %v151
    %174 = vmatprep.subr.bf16.mxu0 0
    %175 = vmatpush1.bf16.msra.mxu0 %v150
    %176 = vmatprep.subr.bf16.mxu0 0
    %177 = vmatpush1.bf16.msra.mxu0 %v149
    %178 = vmatprep.subr.bf16.mxu0 0
    %179 = vmatpush1.bf16.msra.mxu0 %v148
    %180 = vmatprep.subr.bf16.mxu0 0
    %181 = vmatpush2.bf16.msra.mxu0 0
    %182 = vmatprep.subr.bf16.mxu0 0
    %183 = vmatpush2.bf16.msra.mxu0 0
    %184 = vmatprep.subr.bf16.mxu0 0
    %185 = vmatpush2.bf16.msra.mxu0 0
    %186 = vmatprep.subr.bf16.mxu0 0
    %187 = vmatpush2.bf16.msra.mxu0 0
    %188 = vmatprep.subr.bf16.mxu0 0
    %189 = vmatpush2.bf16.msra.mxu0 0
    %190 = vmatprep.subr.bf16.mxu0 0
    %191 = vmatpush2.bf16.msra.mxu0 0
    %192 = vmatprep.subr.bf16.mxu0 0
    %193 = vmatpush2.bf16.msra.mxu0 0
    %194 = vmatprep.subr.bf16.mxu0 0
    %195 = vmatpush2.bf16.msra.mxu0 0
    %196 = vmatprep.mubr.bf16.mxu0 0
    %197 = vmatmul.mubr.bf16.gmra.mxu0 %v92
    %v198 = vpop.f32.mrf.mxu0
    %v199 = vadd.f32 %v114, %v198
    %v200 = vpop.f32.mrf.mxu0
    %v201 = vpop.f32.mrf.mxu0
    %v202 = vpop.f32.mrf.mxu0
    %203 = vdwg.mxu0
    %vm204 = vcmask 130048
    %v205 = vsel %vm204, %v199, -inf
    %206 = vmax.xlane.f32.xlu0 %v205
    %v207 = vpop.xlane.xlu0 %206
    %v208 = vsub.f32 %v199, %v207
    %v209 = vmul.f32 %v208, 1.442695
    %v210 = vpow.pop %v209
    %v211 = vsel %vm204, %v210, 0.0
    %212 = vadd.xlane.f32.xlu0 %v211
    %v213 = vpop.xlane.xlu0 %212
    %v214 = vrcp.pop %v213
    %v215 = vmul.f32 %v210, %v214
    %216 = vst.msk [vmem:[#allocation2] sm:$0xff] %vm204, %v215
    // Predicated region
    $region22: #{tpu_custom_call.1} parent=1 // pred_check
      _
    $region23: #{tpu_custom_call.1} parent=1 // pred_check_branch
      %218 = sbr.rel (0) target = $region25
    $region24: #{tpu_custom_call.1} parent=1 // pred_region
      %s220 = ssub.s32 128, 128
      %221 = vsyncadd [#allocation3], %s220
      %s223 = sshll.u32 [#allocation2], 4
      %s224 = int_to_ptr.vmem [resolvable:$true] %s223
      %226 = dma.vmem_to_hbm [thread:$0]  %s224, 128, %s5, [#allocation3]
    $region25: #{tpu_custom_call.1} parent=1 // pred_fallthru
      _
    // Predicated region
    $region26: #{tpu_custom_call.1} parent=1 // pred_check
      _
    $region27: #{tpu_custom_call.1} parent=1 // pred_check_branch
      %228 = sbr.rel (0) target = $region29
    $region28: #{tpu_custom_call.1} parent=1 // pred_region
      %229 = dma.done [#allocation3], 128
    $region29: #{tpu_custom_call.1} parent=1 // pred_fallthru
      _
    %230 = vsyncpa [#allocation3], 1

</llo_original>
